<compile_context>
chip_gen: v7x
topology: tpu7x:2x2x1
jax: 0.10.0
libtpu: 0.0.40
codegen_flags: <defaults>
</compile_context>

<pallas_src>
import functools

import jax
import jax.numpy as jnp
import numpy as np
from jax import lax
from jax.experimental import pallas as pl
from jax.experimental.pallas import tpu as pltpu

# Small, module-consistent demo shapes (real module: INPUT_SIZE=14500, H=64, O=10).
INPUT_SIZE = 128
HIDDEN = 64
OUT = 10
BATCH = 2
SEQ = 8


def _round_up(n, m):
    return ((n + m - 1) // m) * m


# ---------------------------------------------------------------------------
# Kernel 1: hoisted input projection  gates_x(partial) = x @ W_ih^T
# grid = (k_splits, M tiles, K tiles).  o_ref block index is constant over the
# K axis -> resident accumulator (no scratch).  Bias is added later (kernel 2).
# ---------------------------------------------------------------------------
def input_proj_kernel(x_ref, w_ref, o_ref):
    k = pl.program_id(2)

    @pl.when(k == 0)
    def _init():
        o_ref[...] = jnp.zeros_like(o_ref)

    o_ref[...] += jnp.dot(x_ref[...].astype(w_ref.dtype), w_ref[...],
                          preferred_element_type=jnp.float32)


# ---------------------------------------------------------------------------
# Kernel 2: LSTM recurrence over coarse time blocks (TB steps per grid step)
# with an unrolled in-kernel fori_loop; only h @ W_hh^T stays in the loop.
# ---------------------------------------------------------------------------
def lstm_recurrence_kernel(gx_ref, whh_ref, bias_ref, wout_ref, bout_ref,
                           out_ref, h_scr, c_scr, *, tb, t_valid, hidden):
    H = hidden
    blk = pl.program_id(0)
    nblk = pl.num_programs(0)

    @pl.when(blk == 0)
    def _init():
        h_scr[...] = jnp.zeros_like(h_scr)
        c_scr[...] = jnp.zeros_like(c_scr)

    bias = bias_ref[...]      # (1, 4H)  f32, hoisted out of the loop
    whh = whh_ref[...]        # (H, 4H)  f32 (tiny; kept f32 for parity)
    needs_mask = (t_valid % tb) != 0     # static: only the last block can pad

    def step(t, carry):
        h, c = carry
        gates = gx_ref[t] + bias + jnp.dot(h, whh,
                                           preferred_element_type=jnp.float32)
        # gate order [i, f, o, g]; sigmoid(x) = 0.5*tanh(0.5*x)+0.5 keeps the
        # whole 3H slab on one tanh-class EUP op (half the transcendental work).
        sig = 0.5 * jnp.tanh(0.5 * gates[:, :3 * H]) + 0.5
        i_g = sig[:, 0 * H:1 * H]
        f_g = sig[:, 1 * H:2 * H]
        o_g = sig[:, 2 * H:3 * H]
        g_g = jnp.tanh(gates[:, 3 * H:])
        c_new = f_g * c + i_g * g_g
        h_new = o_g * jnp.tanh(c_new)
        if needs_mask:
            valid = (blk * tb + t) < t_valid
            h_new = jnp.where(valid, h_new, h)
            c_new = jnp.where(valid, c_new, c)
        return h_new, c_new

    h, c = lax.fori_loop(0, tb, step, (h_scr[...], c_scr[...]), unroll=True)

    @pl.when(blk < nblk - 1)          # carry writeback is dead on the last block
    def _carry():
        h_scr[...] = h
        c_scr[...] = c

    @pl.when(blk == nblk - 1)
    def _final():
        out_ref[...] = (jnp.dot(h, wout_ref[...],
                                preferred_element_type=jnp.float32)
                        + bout_ref[...]).astype(out_ref.dtype)


# ---------------------------------------------------------------------------
# One-time weight prep (do NOT call per forward).
# ---------------------------------------------------------------------------
def prepare_params(params, *, compute_dtype=jnp.bfloat16, k_block=2048,
                   k_splits=1):
    H = params["w_hh"].shape[1]
    O = params["w_out"].shape[0]
    D = params["w_ih"].shape[1]
    G = 4 * H

    def reorder(w):   # PyTorch [i, f, g, o] -> [i, f, o, g]
        return jnp.concatenate([w[:2 * H], w[3 * H:], w[2 * H:3 * H]], axis=0)

    # K tiling: lane-dense pad of D; K_pad divisible by k_splits * tk so an
    # optional leading "parallel" grid axis can split the W_ih stream across
    # both v7x TensorCores.
    D_pad = _round_up(D, 128)
    tk = max(128, (min(k_block, D_pad) // 128) * 128)
    K_pad = _round_up(D_pad, tk * k_splits)
    O_pad = _round_up(O, 128)

    w_ih = reorder(params["w_ih"])                      # (4H, D)
    w_hh = reorder(params["w_hh"])                      # (4H, H)
    bias = reorder(params["b_ih"] + params["b_hh"])     # (4H,)

    return {
        "wih_t": jnp.pad(w_ih.T, ((0, K_pad - D), (0, 0))).astype(compute_dtype),
        "whh_t": w_hh.T.astype(jnp.float32),            # tiny -> keep f32
        "bias": bias[None, :].astype(jnp.float32),
        "wout_t": jnp.pad(params["w_out"].T,
                          ((0, 0), (0, O_pad - O))).astype(jnp.float32),
        "bout": jnp.pad(params["b_out"], (0, O_pad - O))[None, :].astype(jnp.float32),
        "compute_dtype": compute_dtype,
        "D": D, "H": H, "O": O, "G": G,
        "tk": tk, "K_pad": K_pad, "k_splits": k_splits, "O_pad": O_pad,
    }


# ---------------------------------------------------------------------------
# Forward
# ---------------------------------------------------------------------------
def rnn_forward(x, prep, *, time_block=32, m_rows_cap=1024):
    """x: (B, T, D) float32, batch_first — same convention as the PyTorch module."""
    B, T, D = x.shape
    assert D == prep["D"]
    H, G, O = prep["H"], prep["G"], prep["O"]
    O_pad, K_pad, tk = prep["O_pad"], prep["K_pad"], prep["tk"]
    k_splits = prep["k_splits"]
    cdt = prep["compute_dtype"]

    B_pad = _round_up(B, 8)                 # f32 sublane multiple

    # Time blocking: pad T up to a multiple of TB and mask the tail in-kernel
    # (never degrade to 1 step per grid iteration for awkward T).
    TB = min(time_block, T)
    T_pad = _round_up(T, TB)
    M = T_pad * B_pad

    # One M tile whenever it fits the cap: each extra M tile re-streams W_ih.
    t_rows = min(T_pad, max(1, m_rows_cap // B_pad))
    while T_pad % t_rows:
        t_rows -= 1
    tm = B_pad * t_rows

    # Single fused pass over x: time-major transpose, batch/time/K zero-pad,
    # flatten, cast to the compute dtype (halves the kernel-1 x DMA for bf16).
    x_flat = jnp.pad(jnp.transpose(x, (1, 0, 2)),
                     ((0, T_pad - T), (0, B_pad - B), (0, K_pad - D))
                     ).reshape(M, K_pad).astype(cdt)

    k_tiles = K_pad // (tk * k_splits)

    # ===== 1) hoisted input projection (one big MXU matmul over all steps) ===
    partial = pl.pallas_call(
        input_proj_kernel,
        out_shape=jax.ShapeDtypeStruct((k_splits, M, G), jnp.float32),
        grid_spec=pltpu.PrefetchScalarGridSpec(
            num_scalar_prefetch=0,
            grid=(k_splits, M // tm, k_tiles),
            in_specs=[
                pl.BlockSpec((tm, tk), lambda c, i, k: (i, c * k_tiles + k)),
                pl.BlockSpec((tk, G), lambda c, i, k: (c * k_tiles + k, 0)),
            ],
            out_specs=pl.BlockSpec((None, tm, G), lambda c, i, k: (c, i, 0)),
        ),
        compiler_params=pltpu.CompilerParams(
            dimension_semantics=("parallel", "parallel", "arbitrary"),
            vmem_limit_bytes=32 << 20),
    )(x_flat, prep["wih_t"])

    gates_x = (partial.sum(axis=0) if k_splits > 1 else partial[0])
    gates_x = gates_x.reshape(T_pad, B_pad, G)

    # ===== 2) recurrence over coarse time blocks =============================
    kern = functools.partial(lstm_recurrence_kernel, tb=TB, t_valid=T, hidden=H)
    out_pad = pl.pallas_call(
        kern,
        out_shape=jax.ShapeDtypeStruct((B_pad, O_pad), jnp.float32),
        grid_spec=pltpu.PrefetchScalarGridSpec(
            num_scalar_prefetch=0,
            grid=(T_pad // TB,),
            in_specs=[
                pl.BlockSpec((TB, B_pad, G), lambda i: (i, 0, 0)),   # gates_x block
                pl.BlockSpec((H, G), lambda i: (0, 0)),              # W_hh^T (resident)
                pl.BlockSpec((1, G), lambda i: (0, 0)),              # fused bias
                pl.BlockSpec((H, O_pad), lambda i: (0, 0)),          # W_out^T
                pl.BlockSpec((1, O_pad), lambda i: (0, 0)),          # b_out
            ],
            out_specs=pl.BlockSpec((B_pad, O_pad), lambda i: (0, 0)),
            scratch_shapes=[pltpu.VMEM((B_pad, H), jnp.float32),     # h state
                            pltpu.VMEM((B_pad, H), jnp.float32)],    # c state
        ),
        compiler_params=pltpu.CompilerParams(
            dimension_semantics=("arbitrary",)),     # serial recurrence in time
    )(gates_x, prep["whh_t"], prep["bias"], prep["wout_t"], prep["bout"])

    return out_pad[:B, :O]


# ---------------------------------------------------------------------------
# Init + pure-JAX reference
# ---------------------------------------------------------------------------
def init_params(key, input_size, hidden, out_dim):
    ks = jax.random.split(key, 6)
    s = 1.0 / np.sqrt(hidden)
    return {
        "w_ih": jax.random.uniform(ks[0], (4 * hidden, input_size), jnp.float32, -s, s),
        "w_hh": jax.random.uniform(ks[1], (4 * hidden, hidden), jnp.float32, -s, s),
        "b_ih": jax.random.uniform(ks[2], (4 * hidden,), jnp.float32, -s, s),
        "b_hh": jax.random.uniform(ks[3], (4 * hidden,), jnp.float32, -s, s),
        "w_out": jax.random.uniform(ks[4], (out_dim, hidden), jnp.float32, -s, s),
        "b_out": jax.random.uniform(ks[5], (out_dim,), jnp.float32, -s, s),
    }


def rnn_forward_ref(x, params):
    """Pure-JAX reference of the PyTorch forward (HIGHEST precision matmuls)."""
    hp = lax.Precision.HIGHEST
    B, T, D = x.shape
    H = params["w_hh"].shape[1]
    h = jnp.zeros((B, H), jnp.float32)
    c = jnp.zeros((B, H), jnp.float32)
    for t in range(T):
        gates = (jnp.dot(x[:, t, :], params["w_ih"].T, precision=hp) + params["b_ih"]
                 + jnp.dot(h, params["w_hh"].T, precision=hp) + params["b_hh"])
        i_g = jax.nn.sigmoid(gates[:, 0 * H:1 * H])
        f_g = jax.nn.sigmoid(gates[:, 1 * H:2 * H])
        g_g = jnp.tanh(gates[:, 2 * H:3 * H])
        o_g = jax.nn.sigmoid(gates[:, 3 * H:4 * H])
        c = f_g * c + i_g * g_g
        h = o_g * jnp.tanh(c)
    return jnp.dot(h, params["w_out"].T, precision=hp) + params["b_out"]


if __name__ == "__main__":
    key = jax.random.PRNGKey(0)
    k_x, k_p, k_x2, k_p2 = jax.random.split(key, 4)

    x = jax.random.normal(k_x, (BATCH, SEQ, INPUT_SIZE), jnp.float32)
    params = init_params(k_p, INPUT_SIZE, HIDDEN, OUT)
    ref = rnn_forward_ref(x, params)

    # f32 compute path: tight-ish check against the PyTorch-semantics reference.
    prep_f32 = prepare_params(params, compute_dtype=jnp.float32)
    out_f32 = jax.block_until_ready(rnn_forward(x, prep_f32))
    assert out_f32.shape == (BATCH, OUT)
    np.testing.assert_allclose(np.asarray(out_f32), np.asarray(ref),
                               atol=1e-3, rtol=1e-3)

    # bf16 W_ih-streaming path (the production config for INPUT_SIZE=14500).
    prep_bf16 = prepare_params(params, compute_dtype=jnp.bfloat16)
    out_bf16 = jax.block_until_ready(rnn_forward(x, prep_bf16))
    assert out_bf16.shape == (BATCH, OUT)
    np.testing.assert_allclose(np.asarray(out_bf16), np.asarray(ref),
                               atol=5e-2, rtol=5e-2)

    # Dual-TensorCore K-split path (v7x) + awkward T exercising the masked tail.
    D2, T2 = 384, 11
    x2 = jax.random.normal(k_x2, (BATCH, T2, D2), jnp.float32)
    params2 = init_params(k_p2, D2, HIDDEN, OUT)
    prep2 = prepare_params(params2, compute_dtype=jnp.float32,
                           k_block=128, k_splits=2)
    out2 = jax.block_until_ready(rnn_forward(x2, prep2, time_block=4))
    np.testing.assert_allclose(np.asarray(out2),
                               np.asarray(rnn_forward_ref(x2, params2)),
                               atol=1e-3, rtol=1e-3)

    print("KERNEL_OK")
</pallas_src>

<mosaic_0001>
module attributes {stable_mosaic.version = 11 : i64} {
  func.func @input_proj_kernel(%arg0: i32, %arg1: i32, %arg2: i32, %arg3: memref<64x128xf32, #tpu.memory_space<vmem>>, %arg4: memref<128x256xf32, #tpu.memory_space<vmem>>, %arg5: memref<1x64x256xf32, #tpu.memory_space<vmem>>) attributes {dimension_semantics = [#tpu.dimension_semantics<parallel>, #tpu.dimension_semantics<parallel>, #tpu.dimension_semantics<arbitrary>], iteration_bounds = array<i64: 1, 1, 1>, scalar_prefetch = 0 : i64, scratch_operands = 0 : i64, tpu.core_type = #tpu.core_type<tc>, window_params = [{transform_indices = @transform_0, window_bounds = array<i64: 64, 128>}, {transform_indices = @transform_1, window_bounds = array<i64: 128, 256>}, {transform_indices = @transform_2, window_bounds = array<i64: 1, 64, 256>}]} {
    %c0_i32 = arith.constant 0 : i32
    %0 = arith.cmpi eq, %arg2, %c0_i32 : i32
    %1 = arith.extui %0 : i1 to i32
    %c0_i32_0 = arith.constant 0 : i32
    %2 = arith.cmpi ne, %1, %c0_i32_0 : i32
    scf.if %2 {
      %cst_10 = arith.constant 0.000000e+00 : f32
      %12 = vector.broadcast %cst_10 : f32 to vector<64x256xf32>
      %c0_11 = arith.constant 0 : index
      %c0_12 = arith.constant 0 : index
      %c0_13 = arith.constant 0 : index
      %13 = vector.load %arg5[%c0_11, %c0_12, %c0_13] : memref<1x64x256xf32, #tpu.memory_space<vmem>>, vector<1x64x256xf32>
      %14 = vector.shape_cast %13 : vector<1x64x256xf32> to vector<64x256xf32>
      %15 = vector.shape_cast %12 : vector<64x256xf32> to vector<1x64x256xf32>
      tpu.vector_store %arg5[%c0_11, %c0_12, %c0_13], %15 {strides = array<i32>} : memref<1x64x256xf32, #tpu.memory_space<vmem>>, vector<1x64x256xf32>,
    } else {
    }
    %c0 = arith.constant 0 : index
    %c0_1 = arith.constant 0 : index
    %c0_2 = arith.constant 0 : index
    %3 = vector.load %arg5[%c0, %c0_1, %c0_2] : memref<1x64x256xf32, #tpu.memory_space<vmem>>, vector<1x64x256xf32>
    %4 = vector.shape_cast %3 : vector<1x64x256xf32> to vector<64x256xf32>
    %c0_3 = arith.constant 0 : index
    %c0_4 = arith.constant 0 : index
    %5 = vector.load %arg3[%c0_3, %c0_4] : memref<64x128xf32, #tpu.memory_space<vmem>>, vector<64x128xf32>
    %c0_5 = arith.constant 0 : index
    %c0_6 = arith.constant 0 : index
    %6 = vector.load %arg4[%c0_5, %c0_6] : memref<128x256xf32, #tpu.memory_space<vmem>>, vector<128x256xf32>
    %cst = arith.constant dense<0.000000e+00> : vector<64x256xf32>
    %7 = tpu.matmul %5, %6, %cst {dimension_numbers = #tpu.dot_dimension_numbers<[1], [0], [0], [1], [0, 0, 1, 1], [], []>} : vector<64x128xf32>, vector<128x256xf32>, vector<64x256xf32> -> vector<64x256xf32>
    %8 = arith.addf %4, %7 : vector<64x256xf32>
    %c0_7 = arith.constant 0 : index
    %c0_8 = arith.constant 0 : index
    %c0_9 = arith.constant 0 : index
    %9 = vector.load %arg5[%c0_7, %c0_8, %c0_9] : memref<1x64x256xf32, #tpu.memory_space<vmem>>, vector<1x64x256xf32>
    %10 = vector.shape_cast %9 : vector<1x64x256xf32> to vector<64x256xf32>
    %11 = vector.shape_cast %8 : vector<64x256xf32> to vector<1x64x256xf32>
    tpu.vector_store %arg5[%c0_7, %c0_8, %c0_9], %11 {strides = array<i32>} : memref<1x64x256xf32, #tpu.memory_space<vmem>>, vector<1x64x256xf32>,
    return
  }
  func.func @transform_0(%arg0: i32, %arg1: i32, %arg2: i32) -> (i32, i32) {
    %c1_i32 = arith.constant 1 : i32
    %0 = arith.muli %arg0, %c1_i32 : i32
    %1 = arith.addi %0, %arg2 : i32
    %c0_i32 = arith.constant 0 : i32
    return %arg1, %1 : i32, i32
  }
  func.func @transform_1(%arg0: i32, %arg1: i32, %arg2: i32) -> (i32, i32) {
    %c1_i32 = arith.constant 1 : i32
    %0 = arith.muli %arg0, %c1_i32 : i32
    %1 = arith.addi %0, %arg2 : i32
    %c0_i32 = arith.constant 0 : i32
    %c0_i32_0 = arith.constant 0 : i32
    return %1, %c0_i32 : i32, i32
  }
  func.func @transform_2(%arg0: i32, %arg1: i32, %arg2: i32) -> (i32, i32, i32) {
    %c0_i32 = arith.constant 0 : i32
    %c0_i32_0 = arith.constant 0 : i32
    return %arg0, %arg1, %c0_i32 : i32, i32, i32
  }
}

</mosaic_0001>

<llo_original>
// kernel: tpu_custom_call.1
$region0: #{tpu_custom_call.1}
  #allocation0 [shape = 'u32[]', space=smem, size = 0x4, offset = 0x4, fixed_abs, tag = 'smem constant byte address 0x4 - core index']
  #allocation1 [shape = 'u32[144,128]{1,0:T(1,128)}', space=vmem, size = 0x12000, scoped, tag = 'internal scratch']
  %s0 = inlined_call_operand.hbm [shape: f32[64,128], index: 0, kind: input, shape index: {}]
  %s1 = inlined_call_operand.hbm [shape: f32[128,256], index: 1, kind: input, shape index: {}]
  %s2 = inlined_call_operand.hbm [shape: f32[1,64,256], index: 2, kind: output, shape index: {}]
  %s3 = sld [smem:[#allocation0]]
  $region30: #{tpu_custom_call.1} parent=0
    _
  %s5 = ssub.s32 1, %s3
  %s6 = scalar_select 0, %s5, %s3
  $region1: #{tpu_custom_call.1} parent=0
    #allocation2 [shape = 'u8[32768]{0}', space=vmem, size = 0x8000, scoped, tag = 'input window, operand 0, single buffered']
    #allocation3 [shape = 's32[1]{0}', space=sflag, size = 0x4, scoped, tag = 'scoped memory for tpu_custom_call.1']
    #allocation4 [shape = 's32[1]{0}', space=sflag, size = 0x4, scoped, tag = 'scoped memory for tpu_custom_call.1']
    #allocation5 [shape = 'u8[131072]{0}', space=vmem, size = 0x20000, scoped, tag = 'input window, operand 1, single buffered']
    #allocation6 [shape = 's32[1]{0}', space=sflag, size = 0x4, scoped, tag = 'scoped memory for tpu_custom_call.1']
    #allocation7 [shape = 'u8[65536]{0}', space=vmem, size = 0x10000, scoped, tag = 'output window, operand 0, single buffered']
    %7 = vsyncpa [#allocation3], 0
    %8 = vsyncpa [#allocation6], 0
    %9 = vsyncpa [#allocation4], 0
    // Predicated region
    $region2: #{tpu_custom_call.1} parent=1 // pred_check
      _
    $region3: #{tpu_custom_call.1} parent=1 // pred_check_branch
      %11 = sbr.rel (0) target = $region5
    $region4: #{tpu_custom_call.1} parent=1 // pred_region
      %s12 = sadd.s32 0, 0
      %s14 = ssub.s32 1024, 1024
      %15 = vsyncadd [#allocation3], %s14
      %s16 = smul.addr %s12, 128
      %s17 = scalar_lea.hbm %s0, %s16
      %s18 = sshll.u32 [#allocation2], 4
      %s19 = int_to_ptr.vmem [resolvable:$true] %s18
      %24 = dma.hbm_to_vmem [thread:$0]  %s17, 1024, %s19, [#allocation3], 128, 128, 8
    $region5: #{tpu_custom_call.1} parent=1 // pred_fallthru
      _
    // Predicated region
    $region6: #{tpu_custom_call.1} parent=1 // pred_check
      _
    $region7: #{tpu_custom_call.1} parent=1 // pred_check_branch
      %26 = sbr.rel (0) target = $region9
    $region8: #{tpu_custom_call.1} parent=1 // pred_region
      %s27 = sadd.s32 0, 0
      %s28 = smul.u32 16, %s27
      %s30 = ssub.s32 4096, 4096
      %31 = vsyncadd [#allocation6], %s30
      %s32 = smul.addr %s28, 2
      %s33 = smul.addr %s32, 128
      %s34 = scalar_lea.hbm %s1, %s33
      %s35 = sshll.u32 [#allocation5], 4
      %s36 = int_to_ptr.vmem [resolvable:$true] %s35
      %41 = dma.hbm_to_vmem [thread:$0]  %s34, 4096, %s36, [#allocation6], 256, 256, 16
    $region9: #{tpu_custom_call.1} parent=1 // pred_fallthru
      _
    // Predicated region
    $region10: #{tpu_custom_call.1} parent=1 // pred_check
      _
    $region11: #{tpu_custom_call.1} parent=1 // pred_check_branch
      %43 = sbr.rel (0) target = $region13
    $region12: #{tpu_custom_call.1} parent=1 // pred_region
      %44 = dma.done [#allocation3], 1024
    $region13: #{tpu_custom_call.1} parent=1 // pred_fallthru
      _
    // Predicated region
    $region14: #{tpu_custom_call.1} parent=1 // pred_check
      _
    $region15: #{tpu_custom_call.1} parent=1 // pred_check_branch
      %46 = sbr.rel (0) target = $region17
    $region16: #{tpu_custom_call.1} parent=1 // pred_region
      %47 = dma.done [#allocation6], 4096
    $region17: #{tpu_custom_call.1} parent=1 // pred_fallthru
      _
    %s48 = sadd.s32 0, 0
    %s49 = sadd.s32 0, 0
    %s50 = smul.u32 16, %s49
    %p51 = scmp.eq.s32.totalorder 0, 0
    // Predicated region
    $region18: #{tpu_custom_call.1} parent=1 // pred_check
      %p52 = pneg %p51
    $region19: #{tpu_custom_call.1} parent=1 // pred_check_branch
      %54 = sbr.rel (%p52) target = $region21
    $region20: #{tpu_custom_call.1} parent=1 // pred_region
      %55 = vst [vmem:[#allocation7] sm:$0xff] 0.0
      %56 = vst [vmem:[#allocation7 + $0x8] sm:$0xff] 0.0
      %57 = vst [vmem:[#allocation7 + $0x10] sm:$0xff] 0.0
      %58 = vst [vmem:[#allocation7 + $0x18] sm:$0xff] 0.0
      %59 = vst [vmem:[#allocation7 + $0x20] sm:$0xff] 0.0
      %60 = vst [vmem:[#allocation7 + $0x28] sm:$0xff] 0.0
      %61 = vst [vmem:[#allocation7 + $0x30] sm:$0xff] 0.0
      %62 = vst [vmem:[#allocation7 + $0x38] sm:$0xff] 0.0
      %63 = vst [vmem:[#allocation7 + $0x40] sm:$0xff] 0.0
      %64 = vst [vmem:[#allocation7 + $0x48] sm:$0xff] 0.0
      %65 = vst [vmem:[#allocation7 + $0x50] sm:$0xff] 0.0
      %66 = vst [vmem:[#allocation7 + $0x58] sm:$0xff] 0.0
      %67 = vst [vmem:[#allocation7 + $0x60] sm:$0xff] 0.0
      %68 = vst [vmem:[#allocation7 + $0x68] sm:$0xff] 0.0
      %69 = vst [vmem:[#allocation7 + $0x70] sm:$0xff] 0.0
      %70 = vst [vmem:[#allocation7 + $0x78] sm:$0xff] 0.0
    $region21: #{tpu_custom_call.1} parent=1 // pred_fallthru
      _
    %v71 = vld [vmem:[#allocation7] sm:$0xff]
    %v72 = vld [vmem:[#allocation7 + $0x8] sm:$0xff]
    %v73 = vld [vmem:[#allocation7 + $0x10] sm:$0xff]
    %v74 = vld [vmem:[#allocation7 + $0x18] sm:$0xff]
    %v75 = vld [vmem:[#allocation7 + $0x20] sm:$0xff]
    %v76 = vld [vmem:[#allocation7 + $0x28] sm:$0xff]
    %v77 = vld [vmem:[#allocation7 + $0x30] sm:$0xff]
    %v78 = vld [vmem:[#allocation7 + $0x38] sm:$0xff]
    %v79 = vld [vmem:[#allocation7 + $0x40] sm:$0xff]
    %v80 = vld [vmem:[#allocation7 + $0x48] sm:$0xff]
    %v81 = vld [vmem:[#allocation7 + $0x50] sm:$0xff]
    %v82 = vld [vmem:[#allocation7 + $0x58] sm:$0xff]
    %v83 = vld [vmem:[#allocation7 + $0x60] sm:$0xff]
    %v84 = vld [vmem:[#allocation7 + $0x68] sm:$0xff]
    %v85 = vld [vmem:[#allocation7 + $0x70] sm:$0xff]
    %v86 = vld [vmem:[#allocation7 + $0x78] sm:$0xff]
    %v87 = vld [vmem:[#allocation2] sm:$0xff]
    %v88 = vld [vmem:[#allocation2 + $0x8] sm:$0xff]
    %v89 = vld [vmem:[#allocation2 + $0x10] sm:$0xff]
    %v90 = vld [vmem:[#allocation2 + $0x18] sm:$0xff]
    %v91 = vld [vmem:[#allocation2 + $0x20] sm:$0xff]
    %v92 = vld [vmem:[#allocation2 + $0x28] sm:$0xff]
    %v93 = vld [vmem:[#allocation2 + $0x30] sm:$0xff]
    %v94 = vld [vmem:[#allocation2 + $0x38] sm:$0xff]
    %v95 = vld [vmem:[#allocation5] sm:$0xff]
    %v96 = vld [vmem:[#allocation5 + $0x8] sm:$0xff]
    %v97 = vld [vmem:[#allocation5 + $0x10] sm:$0xff]
    %v98 = vld [vmem:[#allocation5 + $0x18] sm:$0xff]
    %v99 = vld [vmem:[#allocation5 + $0x20] sm:$0xff]
    %v100 = vld [vmem:[#allocation5 + $0x28] sm:$0xff]
    %v101 = vld [vmem:[#allocation5 + $0x30] sm:$0xff]
    %v102 = vld [vmem:[#allocation5 + $0x38] sm:$0xff]
    %v103 = vld [vmem:[#allocation5 + $0x40] sm:$0xff]
    %v104 = vld [vmem:[#allocation5 + $0x48] sm:$0xff]
    %v105 = vld [vmem:[#allocation5 + $0x50] sm:$0xff]
    %v106 = vld [vmem:[#allocation5 + $0x58] sm:$0xff]
    %v107 = vld [vmem:[#allocation5 + $0x60] sm:$0xff]
    %v108 = vld [vmem:[#allocation5 + $0x68] sm:$0xff]
    %v109 = vld [vmem:[#allocation5 + $0x70] sm:$0xff]
    %v110 = vld [vmem:[#allocation5 + $0x78] sm:$0xff]
    %v111 = vld [vmem:[#allocation5 + $0x80] sm:$0xff]
    %v112 = vld [vmem:[#allocation5 + $0x88] sm:$0xff]
    %v113 = vld [vmem:[#allocation5 + $0x90] sm:$0xff]
    %v114 = vld [vmem:[#allocation5 + $0x98] sm:$0xff]
    %v115 = vld [vmem:[#allocation5 + $0xa0] sm:$0xff]
    %v116 = vld [vmem:[#allocation5 + $0xa8] sm:$0xff]
    %v117 = vld [vmem:[#allocation5 + $0xb0] sm:$0xff]
    %v118 = vld [vmem:[#allocation5 + $0xb8] sm:$0xff]
    %v119 = vld [vmem:[#allocation5 + $0xc0] sm:$0xff]
    %v120 = vld [vmem:[#allocation5 + $0xc8] sm:$0xff]
    %v121 = vld [vmem:[#allocation5 + $0xd0] sm:$0xff]
    %v122 = vld [vmem:[#allocation5 + $0xd8] sm:$0xff]
    %v123 = vld [vmem:[#allocation5 + $0xe0] sm:$0xff]
    %v124 = vld [vmem:[#allocation5 + $0xe8] sm:$0xff]
    %v125 = vld [vmem:[#allocation5 + $0xf0] sm:$0xff]
    %v126 = vld [vmem:[#allocation5 + $0xf8] sm:$0xff]
    %127 = vmatprep.subr.mxu0 %v96
    %128 = vmatpush1.msra.mxu0 %v95
    %129 = vmatprep.subr.mxu0 %v98
    %130 = vmatpush1.msra.mxu0 %v97
    %131 = vmatprep.subr.mxu0 %v100
    %132 = vmatpush1.msra.mxu0 %v99
    %133 = vmatprep.subr.mxu0 %v102
    %134 = vmatpush1.msra.mxu0 %v101
    %135 = vmatprep.subr.mxu0 %v104
    %136 = vmatpush1.msra.mxu0 %v103
    %137 = vmatprep.subr.mxu0 %v106
    %138 = vmatpush1.msra.mxu0 %v105
    %139 = vmatprep.subr.mxu0 %v108
    %140 = vmatpush1.msra.mxu0 %v107
    %141 = vmatprep.subr.mxu0 %v110
    %142 = vmatpush1.msra.mxu0 %v109
    %143 = vmatprep.subr.mxu0 %v112
    %144 = vmatpush1.msra.mxu0 %v111
    %145 = vmatprep.subr.mxu0 %v114
    %146 = vmatpush1.msra.mxu0 %v113
    %147 = vmatprep.subr.mxu0 %v116
    %148 = vmatpush1.msra.mxu0 %v115
    %149 = vmatprep.subr.mxu0 %v118
    %150 = vmatpush1.msra.mxu0 %v117
    %151 = vmatprep.subr.mxu0 %v120
    %152 = vmatpush1.msra.mxu0 %v119
    %153 = vmatprep.subr.mxu0 %v122
    %154 = vmatpush1.msra.mxu0 %v121
    %155 = vmatprep.subr.mxu0 %v124
    %156 = vmatpush1.msra.mxu0 %v123
    %157 = vmatprep.subr.mxu0 %v126
    %158 = vmatpush1.msra.mxu0 %v125
    %159 = vmatprep.subr.mxu0 0.0
    %160 = vmatpush1.msra.mxu0 0.0
    %161 = vmatprep.subr.mxu0 0.0
    %162 = vmatpush1.msra.mxu0 0.0
    %163 = vmatprep.subr.mxu0 0.0
    %164 = vmatpush1.msra.mxu0 0.0
    %165 = vmatprep.subr.mxu0 0.0
    %166 = vmatpush1.msra.mxu0 0.0
    %167 = vmatprep.subr.mxu0 0.0
    %168 = vmatpush1.msra.mxu0 0.0
    %169 = vmatprep.subr.mxu0 0.0
    %170 = vmatpush1.msra.mxu0 0.0
    %171 = vmatprep.subr.mxu0 0.0
    %172 = vmatpush1.msra.mxu0 0.0
    %173 = vmatprep.subr.mxu0 0.0
    %174 = vmatpush1.msra.mxu0 0.0
    %175 = vmatprep.subr.mxu0 0.0
    %176 = vmatpush1.msra.mxu0 0.0
    %177 = vmatprep.subr.mxu0 0.0
    %178 = vmatpush1.msra.mxu0 0.0
    %179 = vmatprep.subr.mxu0 0.0
    %180 = vmatpush1.msra.mxu0 0.0
    %181 = vmatprep.subr.mxu0 0.0
    %182 = vmatpush1.msra.mxu0 0.0
    %183 = vmatprep.subr.mxu0 0.0
    %184 = vmatpush1.msra.mxu0 0.0
    %185 = vmatprep.subr.mxu0 0.0
    %186 = vmatpush1.msra.mxu0 0.0
    %187 = vmatprep.subr.mxu0 0.0
    %188 = vmatpush1.msra.mxu0 0.0
    %189 = vmatprep.subr.mxu0 0.0
    %190 = vmatpush1.msra.mxu0 0.0
    %191 = vmatprep.mubr.f32.mxu0 0.0
    %192 = vmatmul.mubr.f32.gmra.mrb[0].mxu0 %v87
    %v193 = vpop.f32.mrb[0].mxu0
    %v194 = vadd.f32 0.0, %v193
    %v195 = vpop.f32.mrb[0].mxu0
    %v196 = vadd.f32 0.0, %v195
    %197 = vmatprep.mubr.f32.mxu0 0.0
    %198 = vmatmul.mubr.f32.gmra.mrb[0].mxu0 %v88
    %v199 = vpop.f32.mrb[0].mxu0
    %v200 = vadd.f32 0.0, %v199
    %v201 = vpop.f32.mrb[0].mxu0
    %v202 = vadd.f32 0.0, %v201
    %203 = vmatprep.mubr.f32.mxu0 0.0
    %204 = vmatmul.mubr.f32.gmra.mrb[0].mxu0 %v89
    %v205 = vpop.f32.mrb[0].mxu0
    %v206 = vadd.f32 0.0, %v205
    %v207 = vpop.f32.mrb[0].mxu0
    %v208 = vadd.f32 0.0, %v207
    %209 = vmatprep.mubr.f32.mxu0 0.0
    %210 = vmatmul.mubr.f32.gmra.mrb[0].mxu0 %v90
    %v211 = vpop.f32.mrb[0].mxu0
    %v212 = vadd.f32 0.0, %v211
    %v213 = vpop.f32.mrb[0].mxu0
    %v214 = vadd.f32 0.0, %v213
    %215 = vmatprep.mubr.f32.mxu0 0.0
    %216 = vmatmul.mubr.f32.gmra.mrb[0].mxu0 %v91
    %v217 = vpop.f32.mrb[0].mxu0
    %v218 = vadd.f32 0.0, %v217
    %v219 = vpop.f32.mrb[0].mxu0
    %v220 = vadd.f32 0.0, %v219
    %221 = vmatprep.mubr.f32.mxu0 0.0
    %222 = vmatmul.mubr.f32.gmra.mrb[0].mxu0 %v92
    %v223 = vpop.f32.mrb[0].mxu0
    %v224 = vadd.f32 0.0, %v223
    %v225 = vpop.f32.mrb[0].mxu0
    %v226 = vadd.f32 0.0, %v225
    %227 = vmatprep.mubr.f32.mxu0 0.0
    %228 = vmatmul.mubr.f32.gmra.mrb[0].mxu0 %v93
    %v229 = vpop.f32.mrb[0].mxu0
    %v230 = vadd.f32 0.0, %v229
    %v231 = vpop.f32.mrb[0].mxu0
    %v232 = vadd.f32 0.0, %v231
    %233 = vmatprep.mubr.f32.mxu0 0.0
    %234 = vmatmul.mubr.f32.gmra.mrb[0].mxu0 %v94
    %v235 = vpop.f32.mrb[0].mxu0
    %v236 = vadd.f32 0.0, %v235
    %v237 = vpop.f32.mrb[0].mxu0
    %v238 = vadd.f32 0.0, %v237
    %239 = vdwg.mxu0
    %v240 = vadd.f32 %v71, %v194
    %v241 = vadd.f32 %v72, %v196
    %v242 = vadd.f32 %v73, %v200
    %v243 = vadd.f32 %v74, %v202
    %v244 = vadd.f32 %v75, %v206
    %v245 = vadd.f32 %v76, %v208
    %v246 = vadd.f32 %v77, %v212
    %v247 = vadd.f32 %v78, %v214
    %v248 = vadd.f32 %v79, %v218
    %v249 = vadd.f32 %v80, %v220
    %v250 = vadd.f32 %v81, %v224
    %v251 = vadd.f32 %v82, %v226
    %v252 = vadd.f32 %v83, %v230
    %v253 = vadd.f32 %v84, %v232
    %v254 = vadd.f32 %v85, %v236
    %v255 = vadd.f32 %v86, %v238
    %256 = vst [vmem:[#allocation7] sm:$0xff] %v240
    %257 = vst [vmem:[#allocation7 + $0x8] sm:$0xff] %v241
    %258 = vst [vmem:[#allocation7 + $0x10] sm:$0xff] %v242
    %259 = vst [vmem:[#allocation7 + $0x18] sm:$0xff] %v243
    %260 = vst [vmem:[#allocation7 + $0x20] sm:$0xff] %v244
    %261 = vst [vmem:[#allocation7 + $0x28] sm:$0xff] %v245
    %262 = vst [vmem:[#allocation7 + $0x30] sm:$0xff] %v246
    %263 = vst [vmem:[#allocation7 + $0x38] sm:$0xff] %v247
    %264 = vst [vmem:[#allocation7 + $0x40] sm:$0xff] %v248
    %265 = vst [vmem:[#allocation7 + $0x48] sm:$0xff] %v249
    %266 = vst [vmem:[#allocation7 + $0x50] sm:$0xff] %v250
    %267 = vst [vmem:[#allocation7 + $0x58] sm:$0xff] %v251
    %268 = vst [vmem:[#allocation7 + $0x60] sm:$0xff] %v252
    %269 = vst [vmem:[#allocation7 + $0x68] sm:$0xff] %v253
    %270 = vst [vmem:[#allocation7 + $0x70] sm:$0xff] %v254
    %271 = vst [vmem:[#allocation7 + $0x78] sm:$0xff] %v255
    // Predicated region
    $region22: #{tpu_custom_call.1} parent=1 // pred_check
      _
    $region23: #{tpu_custom_call.1} parent=1 // pred_check_branch
      %273 = sbr.rel (0) target = $region25
    $region24: #{tpu_custom_call.1} parent=1 // pred_region
      %s275 = ssub.s32 2048, 2048
      %276 = vsyncadd [#allocation4], %s275
      %s277 = sshll.u32 [#allocation7], 4
      %s278 = int_to_ptr.vmem [resolvable:$true] %s277
      %283 = dma.vmem_to_hbm [thread:$0]  %s278, 2048, %s2, [#allocation4], 256, 256, 16
    $region25: #{tpu_custom_call.1} parent=1 // pred_fallthru
      _
    // Predicated region
    $region26: #{tpu_custom_call.1} parent=1 // pred_check
      _
    $region27: #{tpu_custom_call.1} parent=1 // pred_check_branch
      %285 = sbr.rel (0) target = $region29
    $region28: #{tpu_custom_call.1} parent=1 // pred_region
      %286 = dma.done [#allocation4], 2048
    $region29: #{tpu_custom_call.1} parent=1 // pred_fallthru
      _
    %287 = vsyncpa [#allocation3], 1
    %288 = vsyncpa [#allocation6], 1
    %289 = vsyncpa [#allocation4], 1

</llo_original>
